<compile_context>
chip_gen: v5e
topology: v5e:2x2
jax: 0.10.0
libtpu: 0.0.40
codegen_flags: <defaults>
</compile_context>

<pallas_src>
import functools

import jax
import jax.numpy as jnp
from jax import lax
from jax.experimental import pallas as pl
from jax.experimental.pallas import tpu as pltpu

_SUBLANE = 8
_LANE = 128


def _cdiv(a, b):
    return -(-a // b)


def _round_up(n, m):
    return _cdiv(n, m) * m


def _choose_batch_tiling(B, max_tile_b):
    """Pick (tile_b, n_steps) for the batch (lane) axis.

    * Small batches: a single step whose block spans the whole (8-aligned)
      padded batch (full-dim blocks are legal at any width).
    * Otherwise: 128-aligned tiles (multi-step lane blocks must be divisible
      by 128), >= 2 steps so v7x can shard the "parallel" axis across both
      TensorCores, and the tile is shrunk when 128-rounding would pad the
      batch by more than ~12.5% (avoids near-whole-tile waste, e.g. B=520).
    """
    if B <= 2 * _LANE:
        return _round_up(B, _SUBLANE), 1
    n_steps = max(2, _cdiv(B, max_tile_b))
    tile_b = _round_up(_cdiv(B, n_steps), _LANE)
    while tile_b > _LANE and (tile_b * _cdiv(B, tile_b) - B) > B // 8:
        tile_b -= _LANE
    return tile_b, _cdiv(B, tile_b)


def _anet_kernel(x_ref,
                 w1_ref, b1_ref,
                 w2_ref, b2_ref,
                 w3_ref, b3_ref,
                 w4_ref, b4_ref,
                 wo_ref, bo_ref,
                 out_ref,
                 *, n_valid_out, compute_dtype):
    """Fused MLP + masked softmax on a feature-major (features, tile_b) tile."""
    f32 = jnp.float32
    x = x_ref[...]                                        # (K_pad, tile_b)

    def layer(w_ref, b_ref, h):
        a = jnp.dot(w_ref[...], h, preferred_element_type=f32) + b_ref[...]
        return jnp.maximum(a, 0.0).astype(compute_dtype)

    h = layer(w1_ref, b1_ref, x)                          # (64,  tile_b)
    h = layer(w2_ref, b2_ref, h)                          # (128, tile_b)
    h = layer(w3_ref, b3_ref, h)                          # (128, tile_b)
    h = layer(w4_ref, b4_ref, h)                          # (64,  tile_b)
    logits = jnp.dot(wo_ref[...], h, preferred_element_type=f32) + bo_ref[...]

    # Mask the zero-padded feature rows so they contribute exp(.) == 0 to the
    # softmax normalization.
    row = lax.broadcasted_iota(jnp.int32, logits.shape, 0)
    logits = jnp.where(row < n_valid_out, logits, jnp.float32(-1e30))

    # Numerically stable softmax over the feature (sublane) axis.
    m = jnp.max(logits, axis=0, keepdims=True)            # (1, tile_b)
    e = jnp.exp(logits - m)
    denom = jnp.sum(e, axis=0, keepdims=True)
    out_ref[...] = e * pl.reciprocal(denom, approx=True)


def anet_forward(x, params, output_size, *, max_tile_b=2048,
                 compute_dtype=jnp.bfloat16):
    """x: (B, input_size + 1) float32 -> (B, output_size) float32 softmax."""
    B, K = x.shape                            # K = input_size + 1
    K_pad = _round_up(K, _SUBLANE)            # sublane-aligned fc1 contraction
    out_pad = _round_up(output_size, _SUBLANE)
    f32 = jnp.float32
    cdt = compute_dtype

    tile_b, n_steps = _choose_batch_tiling(B, max_tile_b)
    B_pad = tile_b * n_steps

    # Single wrapper-side pass over x: the transpose required by the
    # feature-major layout, with batch/K zero-padding and the compute-dtype
    # cast folded into the same write.  Zero padding is numerically inert
    # (padded K rows meet zero weight columns; padded batch columns are sliced
    # away; padded output feature rows are masked before the softmax).
    x_t = jnp.zeros((K_pad, B_pad), cdt).at[:K, :B].set(x.T.astype(cdt))

    w1 = jnp.zeros((64, K_pad), cdt).at[:, :K].set(params["w1"].astype(cdt))
    wo = jnp.zeros((out_pad, 64), cdt).at[:output_size, :].set(
        params["wo"].astype(cdt))
    bo = jnp.zeros((out_pad, 1), f32).at[:output_size, :].set(params["bo"])

    args = (
        x_t,
        w1, params["b1"].astype(f32),
        params["w2"].astype(cdt), params["b2"].astype(f32),
        params["w3"].astype(cdt), params["b3"].astype(f32),
        params["w4"].astype(cdt), params["b4"].astype(f32),
        wo, bo,
    )

    def _resident(a):
        # Whole array, same block every grid step -> stays VMEM-resident.
        return pl.BlockSpec(a.shape, lambda i: (0, 0))

    in_specs = ([pl.BlockSpec((K_pad, tile_b), lambda i: (0, i))]
                + [_resident(a) for a in args[1:]])

    flops = 2 * B_pad * (K_pad * 64 + 64 * 128 + 128 * 128 + 128 * 64
                         + 64 * out_pad)
    bytes_accessed = (x_t.size * x_t.dtype.itemsize
                      + sum(a.size * a.dtype.itemsize for a in args[1:])
                      + B_pad * out_pad * 4)

    out_t = pl.pallas_call(
        functools.partial(_anet_kernel, n_valid_out=output_size,
                          compute_dtype=cdt),
        out_shape=jax.ShapeDtypeStruct((out_pad, B_pad), f32),
        grid=(n_steps,),
        in_specs=in_specs,
        out_specs=pl.BlockSpec((out_pad, tile_b), lambda i: (0, i)),
        compiler_params=pltpu.CompilerParams(
            dimension_semantics=("parallel",)),
        cost_estimate=pl.CostEstimate(
            flops=flops,
            transcendentals=B_pad * out_pad,
            bytes_accessed=bytes_accessed),
    )(*args)

    return out_t[:output_size, :B].T          # (B, output_size)


def init_params(key, input_size, output_size):
    """PyTorch-style uniform(-1/sqrt(fan_in), +1/sqrt(fan_in)) init.

    Weights stored exactly like nn.Linear: (out_features, in_features);
    biases as (out_features, 1).
    """
    dims = [(64, input_size + 1), (128, 64), (128, 128), (64, 128),
            (output_size, 64)]
    names = ["1", "2", "3", "4", "o"]
    params = {}
    for (fan_out, fan_in), name in zip(dims, names):
        key, kw, kb = jax.random.split(key, 3)
        bound = 1.0 / float(fan_in) ** 0.5
        params[f"w{name}"] = jax.random.uniform(
            kw, (fan_out, fan_in), jnp.float32, -bound, bound)
        params[f"b{name}"] = jax.random.uniform(
            kb, (fan_out, 1), jnp.float32, -bound, bound)
    return params


def ref_forward(x, p):
    """Pure-JAX f32 reference of the same forward pass."""
    h = jnp.maximum(x @ p["w1"].T + p["b1"].T, 0.0)
    h = jnp.maximum(h @ p["w2"].T + p["b2"].T, 0.0)
    h = jnp.maximum(h @ p["w3"].T + p["b3"].T, 0.0)
    h = jnp.maximum(h @ p["w4"].T + p["b4"].T, 0.0)
    logits = h @ p["wo"].T + p["bo"].T
    return jax.nn.softmax(logits, axis=1)


if __name__ == "__main__":
    input_size = 16      # module consumes input_size + 1 = 17 features
    output_size = 10
    batch = 8

    key = jax.random.PRNGKey(0)
    key, kx = jax.random.split(key)
    x = jax.random.normal(kx, (batch, input_size + 1), jnp.float32)
    params = init_params(key, input_size, output_size)

    fwd = jax.jit(functools.partial(anet_forward, output_size=output_size))
    out = jax.block_until_ready(fwd(x, params))

    ref = ref_forward(x, params)
    assert out.shape == (batch, output_size)
    # bf16 matmuls (f32 accumulation) + approximate reciprocal => tolerances
    # are looser than a pure-f32 comparison but still meaningful for softmax
    # probabilities in [0, 1].
    assert jnp.allclose(jnp.sum(out, axis=1), 1.0, atol=1e-2), \
        "softmax rows must sum to 1"
    assert jnp.allclose(out, ref, atol=2.5e-2, rtol=0.0), \
        "mismatch vs float32 reference"

    print("KERNEL_OK")
</pallas_src>

<mosaic_0001>
module attributes {stable_mosaic.version = 11 : i64} {
  func.func @_anet_kernel(%arg0: i32, %arg1: memref<24x8xbf16, #tpu.memory_space<vmem>>, %arg2: memref<64x24xbf16, #tpu.memory_space<vmem>>, %arg3: memref<64x1xf32, #tpu.memory_space<vmem>>, %arg4: memref<128x64xbf16, #tpu.memory_space<vmem>>, %arg5: memref<128x1xf32, #tpu.memory_space<vmem>>, %arg6: memref<128x128xbf16, #tpu.memory_space<vmem>>, %arg7: memref<128x1xf32, #tpu.memory_space<vmem>>, %arg8: memref<64x128xbf16, #tpu.memory_space<vmem>>, %arg9: memref<64x1xf32, #tpu.memory_space<vmem>>, %arg10: memref<16x64xbf16, #tpu.memory_space<vmem>>, %arg11: memref<16x1xf32, #tpu.memory_space<vmem>>, %arg12: memref<16x8xf32, #tpu.memory_space<vmem>>) attributes {dimension_semantics = [#tpu.dimension_semantics<parallel>], iteration_bounds = array<i64: 1>, scalar_prefetch = 0 : i64, scratch_operands = 0 : i64, tpu.core_type = #tpu.core_type<tc>, window_params = [{transform_indices = @transform_0, window_bounds = array<i64: 24, 8>}, {pipeline_mode = #tpu.pipeline_mode<synchronous>, transform_indices = @transform_1, window_bounds = array<i64: 64, 24>}, {pipeline_mode = #tpu.pipeline_mode<synchronous>, transform_indices = @transform_2, window_bounds = array<i64: 64, 1>}, {pipeline_mode = #tpu.pipeline_mode<synchronous>, transform_indices = @transform_3, window_bounds = array<i64: 128, 64>}, {pipeline_mode = #tpu.pipeline_mode<synchronous>, transform_indices = @transform_4, window_bounds = array<i64: 128, 1>}, {pipeline_mode = #tpu.pipeline_mode<synchronous>, transform_indices = @transform_5, window_bounds = array<i64: 128, 128>}, {pipeline_mode = #tpu.pipeline_mode<synchronous>, transform_indices = @transform_6, window_bounds = array<i64: 128, 1>}, {pipeline_mode = #tpu.pipeline_mode<synchronous>, transform_indices = @transform_7, window_bounds = array<i64: 64, 128>}, {pipeline_mode = #tpu.pipeline_mode<synchronous>, transform_indices = @transform_8, window_bounds = array<i64: 64, 1>}, {pipeline_mode = #tpu.pipeline_mode<synchronous>, transform_indices = @transform_9, window_bounds = array<i64: 16, 64>}, {pipeline_mode = #tpu.pipeline_mode<synchronous>, transform_indices = @transform_10, window_bounds = array<i64: 16, 1>}, {transform_indices = @transform_11, window_bounds = array<i64: 16, 8>}]} {
    %c0 = arith.constant 0 : index
    %c0_0 = arith.constant 0 : index
    %0 = vector.load %arg1[%c0, %c0_0] : memref<24x8xbf16, #tpu.memory_space<vmem>>, vector<24x8xbf16>
    %c0_1 = arith.constant 0 : index
    %c0_2 = arith.constant 0 : index
    %1 = vector.load %arg2[%c0_1, %c0_2] : memref<64x24xbf16, #tpu.memory_space<vmem>>, vector<64x24xbf16>
    %cst = arith.constant dense<0.000000e+00> : vector<64x8xf32>
    %2 = tpu.matmul %1, %0, %cst {dimension_numbers = #tpu.dot_dimension_numbers<[1], [0], [0], [1], [0, 0, 1, 1], [], []>} : vector<64x24xbf16>, vector<24x8xbf16>, vector<64x8xf32> -> vector<64x8xf32>
    %c0_3 = arith.constant 0 : index
    %c0_4 = arith.constant 0 : index
    %3 = vector.load %arg3[%c0_3, %c0_4] : memref<64x1xf32, #tpu.memory_space<vmem>>, vector<64x1xf32>
    %4 = vector.broadcast %3 : vector<64x1xf32> to vector<64x8xf32>
    %5 = arith.addf %2, %4 : vector<64x8xf32>
    %cst_5 = arith.constant 0.000000e+00 : f32
    %6 = vector.broadcast %cst_5 : f32 to vector<64x8xf32>
    %7 = arith.maximumf %5, %6 : vector<64x8xf32>
    %8 = arith.truncf %7 : vector<64x8xf32> to vector<64x8xbf16>
    %c0_6 = arith.constant 0 : index
    %c0_7 = arith.constant 0 : index
    %9 = vector.load %arg4[%c0_6, %c0_7] : memref<128x64xbf16, #tpu.memory_space<vmem>>, vector<128x64xbf16>
    %cst_8 = arith.constant dense<0.000000e+00> : vector<128x8xf32>
    %10 = tpu.matmul %9, %8, %cst_8 {dimension_numbers = #tpu.dot_dimension_numbers<[1], [0], [0], [1], [0, 0, 1, 1], [], []>} : vector<128x64xbf16>, vector<64x8xbf16>, vector<128x8xf32> -> vector<128x8xf32>
    %c0_9 = arith.constant 0 : index
    %c0_10 = arith.constant 0 : index
    %11 = vector.load %arg5[%c0_9, %c0_10] : memref<128x1xf32, #tpu.memory_space<vmem>>, vector<128x1xf32>
    %12 = vector.broadcast %11 : vector<128x1xf32> to vector<128x8xf32>
    %13 = arith.addf %10, %12 : vector<128x8xf32>
    %cst_11 = arith.constant 0.000000e+00 : f32
    %14 = vector.broadcast %cst_11 : f32 to vector<128x8xf32>
    %15 = arith.maximumf %13, %14 : vector<128x8xf32>
    %16 = arith.truncf %15 : vector<128x8xf32> to vector<128x8xbf16>
    %c0_12 = arith.constant 0 : index
    %c0_13 = arith.constant 0 : index
    %17 = vector.load %arg6[%c0_12, %c0_13] : memref<128x128xbf16, #tpu.memory_space<vmem>>, vector<128x128xbf16>
    %cst_14 = arith.constant dense<0.000000e+00> : vector<128x8xf32>
    %18 = tpu.matmul %17, %16, %cst_14 {dimension_numbers = #tpu.dot_dimension_numbers<[1], [0], [0], [1], [0, 0, 1, 1], [], []>} : vector<128x128xbf16>, vector<128x8xbf16>, vector<128x8xf32> -> vector<128x8xf32>
    %c0_15 = arith.constant 0 : index
    %c0_16 = arith.constant 0 : index
    %19 = vector.load %arg7[%c0_15, %c0_16] : memref<128x1xf32, #tpu.memory_space<vmem>>, vector<128x1xf32>
    %20 = vector.broadcast %19 : vector<128x1xf32> to vector<128x8xf32>
    %21 = arith.addf %18, %20 : vector<128x8xf32>
    %cst_17 = arith.constant 0.000000e+00 : f32
    %22 = vector.broadcast %cst_17 : f32 to vector<128x8xf32>
    %23 = arith.maximumf %21, %22 : vector<128x8xf32>
    %24 = arith.truncf %23 : vector<128x8xf32> to vector<128x8xbf16>
    %c0_18 = arith.constant 0 : index
    %c0_19 = arith.constant 0 : index
    %25 = vector.load %arg8[%c0_18, %c0_19] : memref<64x128xbf16, #tpu.memory_space<vmem>>, vector<64x128xbf16>
    %cst_20 = arith.constant dense<0.000000e+00> : vector<64x8xf32>
    %26 = tpu.matmul %25, %24, %cst_20 {dimension_numbers = #tpu.dot_dimension_numbers<[1], [0], [0], [1], [0, 0, 1, 1], [], []>} : vector<64x128xbf16>, vector<128x8xbf16>, vector<64x8xf32> -> vector<64x8xf32>
    %c0_21 = arith.constant 0 : index
    %c0_22 = arith.constant 0 : index
    %27 = vector.load %arg9[%c0_21, %c0_22] : memref<64x1xf32, #tpu.memory_space<vmem>>, vector<64x1xf32>
    %28 = vector.broadcast %27 : vector<64x1xf32> to vector<64x8xf32>
    %29 = arith.addf %26, %28 : vector<64x8xf32>
    %cst_23 = arith.constant 0.000000e+00 : f32
    %30 = vector.broadcast %cst_23 : f32 to vector<64x8xf32>
    %31 = arith.maximumf %29, %30 : vector<64x8xf32>
    %32 = arith.truncf %31 : vector<64x8xf32> to vector<64x8xbf16>
    %c0_24 = arith.constant 0 : index
    %c0_25 = arith.constant 0 : index
    %33 = vector.load %arg10[%c0_24, %c0_25] : memref<16x64xbf16, #tpu.memory_space<vmem>>, vector<16x64xbf16>
    %cst_26 = arith.constant dense<0.000000e+00> : vector<16x8xf32>
    %34 = tpu.matmul %33, %32, %cst_26 {dimension_numbers = #tpu.dot_dimension_numbers<[1], [0], [0], [1], [0, 0, 1, 1], [], []>} : vector<16x64xbf16>, vector<64x8xbf16>, vector<16x8xf32> -> vector<16x8xf32>
    %c0_27 = arith.constant 0 : index
    %c0_28 = arith.constant 0 : index
    %35 = vector.load %arg11[%c0_27, %c0_28] : memref<16x1xf32, #tpu.memory_space<vmem>>, vector<16x1xf32>
    %36 = vector.broadcast %35 : vector<16x1xf32> to vector<16x8xf32>
    %37 = arith.addf %34, %36 : vector<16x8xf32>
    %38 = tpu.iota {dimensions = array<i32: 0>} : vector<16x8xi32>
    %c10_i32 = arith.constant 10 : i32
    %39 = vector.broadcast %c10_i32 : i32 to vector<16x8xi32>
    %40 = arith.cmpi slt, %38, %39 : vector<16x8xi32>
    %cst_29 = arith.constant -1.000000e+30 : f32
    %41 = vector.broadcast %cst_29 : f32 to vector<16x8xf32>
    %42 = arith.select %40, %37, %41 : vector<16x8xi1>, vector<16x8xf32>
    %cst_30 = arith.constant dense<0xFF800000> : vector<8xf32>
    %43 = vector.multi_reduction <maximumf>, %42, %cst_30 [0] : vector<16x8xf32> to vector<8xf32>
    %44 = vector.shape_cast %43 : vector<8xf32> to vector<1x8xf32>
    %45 = vector.broadcast %44 : vector<1x8xf32> to vector<16x8xf32>
    %46 = arith.subf %42, %45 : vector<16x8xf32>
    %47 = math.exp %46 : vector<16x8xf32>
    %cst_31 = arith.constant dense<0.000000e+00> : vector<8xf32>
    %48 = vector.multi_reduction <add>, %47, %cst_31 [0] : vector<16x8xf32> to vector<8xf32>
    %49 = vector.shape_cast %48 : vector<8xf32> to vector<1x8xf32>
    %50 = tpu.reciprocal %49 {approx = true} : vector<1x8xf32> -> vector<1x8xf32>
    %51 = vector.broadcast %50 : vector<1x8xf32> to vector<16x8xf32>
    %52 = arith.mulf %47, %51 : vector<16x8xf32>
    %c0_32 = arith.constant 0 : index
    %c0_33 = arith.constant 0 : index
    %53 = vector.load %arg12[%c0_32, %c0_33] : memref<16x8xf32, #tpu.memory_space<vmem>>, vector<16x8xf32>
    tpu.vector_store %arg12[%c0_32, %c0_33], %52 {strides = array<i32>} : memref<16x8xf32, #tpu.memory_space<vmem>>, vector<16x8xf32>,
    return
  }
  func.func @transform_0(%arg0: i32) -> (i32, i32) {
    %c0_i32 = arith.constant 0 : i32
    %c0_i32_0 = arith.constant 0 : i32
    return %c0_i32, %arg0 : i32, i32
  }
  func.func @transform_1(%arg0: i32) -> (i32, i32) {
    %c0_i32 = arith.constant 0 : i32
    %c0_i32_0 = arith.constant 0 : i32
    %c0_i32_1 = arith.constant 0 : i32
    return %c0_i32, %c0_i32_0 : i32, i32
  }
  func.func @transform_2(%arg0: i32) -> (i32, i32) {
    %c0_i32 = arith.constant 0 : i32
    %c0_i32_0 = arith.constant 0 : i32
    %c0_i32_1 = arith.constant 0 : i32
    return %c0_i32, %c0_i32_0 : i32, i32
  }
  func.func @transform_3(%arg0: i32) -> (i32, i32) {
    %c0_i32 = arith.constant 0 : i32
    %c0_i32_0 = arith.constant 0 : i32
    %c0_i32_1 = arith.constant 0 : i32
    return %c0_i32, %c0_i32_0 : i32, i32
  }
  func.func @transform_4(%arg0: i32) -> (i32, i32) {
    %c0_i32 = arith.constant 0 : i32
    %c0_i32_0 = arith.constant 0 : i32
    %c0_i32_1 = arith.constant 0 : i32
    return %c0_i32, %c0_i32_0 : i32, i32
  }
  func.func @transform_5(%arg0: i32) -> (i32, i32) {
    %c0_i32 = arith.constant 0 : i32
    %c0_i32_0 = arith.constant 0 : i32
    %c0_i32_1 = arith.constant 0 : i32
    return %c0_i32, %c0_i32_0 : i32, i32
  }
  func.func @transform_6(%arg0: i32) -> (i32, i32) {
    %c0_i32 = arith.constant 0 : i32
    %c0_i32_0 = arith.constant 0 : i32
    %c0_i32_1 = arith.constant 0 : i32
    return %c0_i32, %c0_i32_0 : i32, i32
  }
  func.func @transform_7(%arg0: i32) -> (i32, i32) {
    %c0_i32 = arith.constant 0 : i32
    %c0_i32_0 = arith.constant 0 : i32
    %c0_i32_1 = arith.constant 0 : i32
    return %c0_i32, %c0_i32_0 : i32, i32
  }
  func.func @transform_8(%arg0: i32) -> (i32, i32) {
    %c0_i32 = arith.constant 0 : i32
    %c0_i32_0 = arith.constant 0 : i32
    %c0_i32_1 = arith.constant 0 : i32
    return %c0_i32, %c0_i32_0 : i32, i32
  }
  func.func @transform_9(%arg0: i32) -> (i32, i32) {
    %c0_i32 = arith.constant 0 : i32
    %c0_i32_0 = arith.constant 0 : i32
    %c0_i32_1 = arith.constant 0 : i32
    return %c0_i32, %c0_i32_0 : i32, i32
  }
  func.func @transform_10(%arg0: i32) -> (i32, i32) {
    %c0_i32 = arith.constant 0 : i32
    %c0_i32_0 = arith.constant 0 : i32
    %c0_i32_1 = arith.constant 0 : i32
    return %c0_i32, %c0_i32_0 : i32, i32
  }
  func.func @transform_11(%arg0: i32) -> (i32, i32) {
    %c0_i32 = arith.constant 0 : i32
    %c0_i32_0 = arith.constant 0 : i32
    return %c0_i32, %arg0 : i32, i32
  }
}

</mosaic_0001>

<llo_original>
// kernel: anet_forward.1
$region0: #{anet_forward.1}
  #allocation0 [shape = 'u32[]', space=smem, size = 0x4, offset = 0x4, fixed_abs, tag = 'smem constant byte address 0x4 - core index']
  #allocation1 [shape = 'u32[72,128]{1,0:T(1,128)}', space=vmem, size = 0x9000, scoped, tag = 'internal scratch']
  %s0 = inlined_call_operand.vmem [shape: bf16[24,8], index: 0, kind: input, shape index: {}]
  %s1 = inlined_call_operand.vmem [shape: bf16[64,24], index: 1, kind: input, shape index: {}]
  %s2 = inlined_call_operand.vmem [shape: f32[64,1], index: 2, kind: input, shape index: {}]
  %s3 = inlined_call_operand.vmem [shape: bf16[128,64], index: 3, kind: input, shape index: {}]
  %s4 = inlined_call_operand.vmem [shape: f32[128,1], index: 4, kind: input, shape index: {}]
  %s5 = inlined_call_operand.vmem [shape: bf16[128,128], index: 5, kind: input, shape index: {}]
  %s6 = inlined_call_operand.vmem [shape: f32[128,1], index: 6, kind: input, shape index: {}]
  %s7 = inlined_call_operand.vmem [shape: bf16[64,128], index: 7, kind: input, shape index: {}]
  %s8 = inlined_call_operand.vmem [shape: f32[64,1], index: 8, kind: input, shape index: {}]
  %s9 = inlined_call_operand.vmem [shape: bf16[16,64], index: 9, kind: input, shape index: {}]
  %s10 = inlined_call_operand.vmem [shape: f32[16,1], index: 10, kind: input, shape index: {}]
  %s11 = inlined_call_operand.vmem [shape: f32[16,8], index: 11, kind: output, shape index: {}]
  %s12 = sld [smem:[#allocation0]]
  $region54: #{anet_forward.1} parent=0
    _
  %s14 = ssub.s32 1, %s12
  %s15 = scalar_select 0, %s14, %s12
  // Predicated region
  $region2: #{anet_forward.1} parent=0 // pred_check
    _
  $region3: #{anet_forward.1} parent=0 // pred_check_branch
    %17 = sbr.rel (0) target = $region5
  $region4: #{anet_forward.1} parent=0 // pred_region
    _
  $region5: #{anet_forward.1} parent=0 // pred_fallthru
    _
  // Predicated region
  $region6: #{anet_forward.1} parent=0 // pred_check
    _
  $region7: #{anet_forward.1} parent=0 // pred_check_branch
    %19 = sbr.rel (0) target = $region9
  $region8: #{anet_forward.1} parent=0 // pred_region
    _
  $region9: #{anet_forward.1} parent=0 // pred_fallthru
    _
  // Predicated region
  $region10: #{anet_forward.1} parent=0 // pred_check
    _
  $region11: #{anet_forward.1} parent=0 // pred_check_branch
    %21 = sbr.rel (0) target = $region13
  $region12: #{anet_forward.1} parent=0 // pred_region
    _
  $region13: #{anet_forward.1} parent=0 // pred_fallthru
    _
  // Predicated region
  $region14: #{anet_forward.1} parent=0 // pred_check
    _
  $region15: #{anet_forward.1} parent=0 // pred_check_branch
    %23 = sbr.rel (0) target = $region17
  $region16: #{anet_forward.1} parent=0 // pred_region
    _
  $region17: #{anet_forward.1} parent=0 // pred_fallthru
    _
  // Predicated region
  $region18: #{anet_forward.1} parent=0 // pred_check
    _
  $region19: #{anet_forward.1} parent=0 // pred_check_branch
    %25 = sbr.rel (0) target = $region21
  $region20: #{anet_forward.1} parent=0 // pred_region
    _
  $region21: #{anet_forward.1} parent=0 // pred_fallthru
    _
  // Predicated region
  $region22: #{anet_forward.1} parent=0 // pred_check
    _
  $region23: #{anet_forward.1} parent=0 // pred_check_branch
    %27 = sbr.rel (0) target = $region25
  $region24: #{anet_forward.1} parent=0 // pred_region
    _
  $region25: #{anet_forward.1} parent=0 // pred_fallthru
    _
  // Predicated region
  $region26: #{anet_forward.1} parent=0 // pred_check
    _
  $region27: #{anet_forward.1} parent=0 // pred_check_branch
    %29 = sbr.rel (0) target = $region29
  $region28: #{anet_forward.1} parent=0 // pred_region
    _
  $region29: #{anet_forward.1} parent=0 // pred_fallthru
    _
  // Predicated region
  $region30: #{anet_forward.1} parent=0 // pred_check
    _
  $region31: #{anet_forward.1} parent=0 // pred_check_branch
    %31 = sbr.rel (0) target = $region33
  $region32: #{anet_forward.1} parent=0 // pred_region
    _
  $region33: #{anet_forward.1} parent=0 // pred_fallthru
    _
  // Predicated region
  $region34: #{anet_forward.1} parent=0 // pred_check
    _
  $region35: #{anet_forward.1} parent=0 // pred_check_branch
    %33 = sbr.rel (0) target = $region37
  $region36: #{anet_forward.1} parent=0 // pred_region
    _
  $region37: #{anet_forward.1} parent=0 // pred_fallthru
    _
  // Predicated region
  $region38: #{anet_forward.1} parent=0 // pred_check
    _
  $region39: #{anet_forward.1} parent=0 // pred_check_branch
    %35 = sbr.rel (0) target = $region41
  $region40: #{anet_forward.1} parent=0 // pred_region
    _
  $region41: #{anet_forward.1} parent=0 // pred_fallthru
    _
  // Predicated region
  $region42: #{anet_forward.1} parent=0 // pred_check
    _
  $region43: #{anet_forward.1} parent=0 // pred_check_branch
    %37 = sbr.rel (0) target = $region45
  $region44: #{anet_forward.1} parent=0 // pred_region
    _
  $region45: #{anet_forward.1} parent=0 // pred_fallthru
    _
  %v39 = vld [vmem:[%s0] sm:$0xf]
  %v40 = vld [vmem:[%s0 + $0x4] sm:$0xf]
  %v41 = vld [vmem:[%s0 + $0x8] sm:$0xf]
  %v42 = vld [vmem:[%s1] sm:$0xf]
  %v43 = vld [vmem:[%s1 + $0x4] sm:$0xf]
  %v44 = vld [vmem:[%s1 + $0x8] sm:$0xf]
  %v45 = vld [vmem:[%s1 + $0xc] sm:$0xf]
  %v46 = vld [vmem:[%s1 + $0x10] sm:$0xf]
  %v47 = vld [vmem:[%s1 + $0x14] sm:$0xf]
  %v48 = vld [vmem:[%s1 + $0x18] sm:$0xf]
  %v49 = vld [vmem:[%s1 + $0x1c] sm:$0xf]
  %v50 = vld [vmem:[%s2] sm:$0xff]
  %v51 = vld [vmem:[%s2 + $0x8] sm:$0xff]
  %v52 = vld [vmem:[%s2 + $0x10] sm:$0xff]
  %v53 = vld [vmem:[%s2 + $0x18] sm:$0xff]
  %v54 = vld [vmem:[%s2 + $0x20] sm:$0xff]
  %v55 = vld [vmem:[%s2 + $0x28] sm:$0xff]
  %v56 = vld [vmem:[%s2 + $0x30] sm:$0xff]
  %v57 = vld [vmem:[%s2 + $0x38] sm:$0xff]
  %59 = vset.pattern.permute.xlu0 0
  %60 = vperm.xlu0 %59, %v50
  %v61 = vpop.permute.xlu0 %60
  %64 = vset.pattern.permute.xlu0 0
  %65 = vperm.xlu0 %64, %v51
  %v66 = vpop.permute.xlu0 %65
  %69 = vset.pattern.permute.xlu0 0
  %70 = vperm.xlu0 %69, %v52
  %v71 = vpop.permute.xlu0 %70
  %74 = vset.pattern.permute.xlu0 0
  %75 = vperm.xlu0 %74, %v53
  %v76 = vpop.permute.xlu0 %75
  %79 = vset.pattern.permute.xlu0 0
  %80 = vperm.xlu0 %79, %v54
  %v81 = vpop.permute.xlu0 %80
  %84 = vset.pattern.permute.xlu0 0
  %85 = vperm.xlu0 %84, %v55
  %v86 = vpop.permute.xlu0 %85
  %89 = vset.pattern.permute.xlu0 0
  %90 = vperm.xlu0 %89, %v56
  %v91 = vpop.permute.xlu0 %90
  %94 = vset.pattern.permute.xlu0 0
  %95 = vperm.xlu0 %94, %v57
  %v96 = vpop.permute.xlu0 %95
  %v106 = vunpack.c.l.b16 %v42
  %v107 = vunpack.c.l.b16 %v43
  %v108 = vunpack.c.l.b16 %v44
  %v109 = vunpack.c.l.b16 %v45
  %v110 = vunpack.c.l.b16 %v46
  %v111 = vunpack.c.l.b16 %v47
  %v112 = vunpack.c.l.b16 %v48
  %v113 = vunpack.c.l.b16 %v49
  %v114 = vpack.c.b16 %v107, %v106
  %v115 = vpack.c.b16 %v109, %v108
  %v116 = vpack.c.b16 %v111, %v110
  %v117 = vpack.c.b16 %v113, %v112
  %v121 = vunpack.c.l.b16 %v39
  %v122 = vunpack.c.l.b16 %v40
  %v123 = vunpack.c.l.b16 %v41
  %v124 = vpack.c.b16 %v122, %v121
  %v125 = vpack.c.b16 %v123, %v123
  %vm127 = vcmask 195584
  %v129 = vsel %vm127, %v114, 0
  %v132 = vsel %vm127, %v115, 0
  %v135 = vsel %vm127, %v116, 0
  %v138 = vsel %vm127, %v117, 0
  %vm140 = vcmask 1043456
  %v142 = vsel %vm140, %v125, 0
  %144 = vmatpush.bf16.msra.mxu0 0
  %145 = vmatpush.bf16.msra.mxu0 0
  %146 = vmatpush.bf16.msra.mxu0 0
  %147 = vmatpush.bf16.msra.mxu0 0
  %148 = vmatpush.bf16.msra.mxu0 0
  %149 = vmatpush.bf16.msra.mxu0 0
  %150 = vmatpush.bf16.msra.mxu0 %v142
  %151 = vmatpush.bf16.msra.mxu0 %v124
  %152 = vmatmul.bf16.gmra.mxu0 %v129
  %v153 = vpop.f32.mrf.mxu0
  %v154 = vadd.f32 %v61, %v153
  %v155 = vpop.f32.mrf.mxu0
  %v156 = vadd.f32 %v66, %v155
  %157 = vmatmul.bf16.gmra.mxu0 %v132
  %v158 = vpop.f32.mrf.mxu0
  %v159 = vadd.f32 %v71, %v158
  %v160 = vpop.f32.mrf.mxu0
  %v161 = vadd.f32 %v76, %v160
  %162 = vmatmul.bf16.gmra.mxu0 %v135
  %v163 = vpop.f32.mrf.mxu0
  %v164 = vadd.f32 %v81, %v163
  %v165 = vpop.f32.mrf.mxu0
  %v166 = vadd.f32 %v86, %v165
  %167 = vmatmul.bf16.gmra.mxu0 %v138
  %v168 = vpop.f32.mrf.mxu0
  %v169 = vadd.f32 %v91, %v168
  %v170 = vpop.f32.mrf.mxu0
  %v171 = vadd.f32 %v96, %v170
  %172 = vdwg.mxu0
  %v173 = vmax.f32 %v154, 0.0
  %v174 = vmax.f32 %v156, 0.0
  %v175 = vmax.f32 %v159, 0.0
  %v176 = vmax.f32 %v161, 0.0
  %v177 = vmax.f32 %v164, 0.0
  %v178 = vmax.f32 %v166, 0.0
  %v179 = vmax.f32 %v169, 0.0
  %v180 = vmax.f32 %v171, 0.0
  %v181 = vpack.c.bf16 %v174, %v173
  %v182 = vpack.c.bf16 %v176, %v175
  %v183 = vpack.c.bf16 %v178, %v177
  %v184 = vpack.c.bf16 %v180, %v179
  %v185 = vld [vmem:[%s3] sm:$0xf]
  %v186 = vld [vmem:[%s3 + $0x4] sm:$0xf]
  %v187 = vld [vmem:[%s3 + $0x8] sm:$0xf]
  %v188 = vld [vmem:[%s3 + $0xc] sm:$0xf]
  %v189 = vld [vmem:[%s3 + $0x10] sm:$0xf]
  %v190 = vld [vmem:[%s3 + $0x14] sm:$0xf]
  %v191 = vld [vmem:[%s3 + $0x18] sm:$0xf]
  %v192 = vld [vmem:[%s3 + $0x1c] sm:$0xf]
  %v193 = vld [vmem:[%s3 + $0x20] sm:$0xf]
  %v194 = vld [vmem:[%s3 + $0x24] sm:$0xf]
  %v195 = vld [vmem:[%s3 + $0x28] sm:$0xf]
  %v196 = vld [vmem:[%s3 + $0x2c] sm:$0xf]
  %v197 = vld [vmem:[%s3 + $0x30] sm:$0xf]
  %v198 = vld [vmem:[%s3 + $0x34] sm:$0xf]
  %v199 = vld [vmem:[%s3 + $0x38] sm:$0xf]
  %v200 = vld [vmem:[%s3 + $0x3c] sm:$0xf]
  %v201 = vld [vmem:[%s4] sm:$0xff]
  %v202 = vld [vmem:[%s4 + $0x8] sm:$0xff]
  %v203 = vld [vmem:[%s4 + $0x10] sm:$0xff]
  %v204 = vld [vmem:[%s4 + $0x18] sm:$0xff]
  %v205 = vld [vmem:[%s4 + $0x20] sm:$0xff]
  %v206 = vld [vmem:[%s4 + $0x28] sm:$0xff]
  %v207 = vld [vmem:[%s4 + $0x30] sm:$0xff]
  %v208 = vld [vmem:[%s4 + $0x38] sm:$0xff]
  %v209 = vld [vmem:[%s4 + $0x40] sm:$0xff]
  %v210 = vld [vmem:[%s4 + $0x48] sm:$0xff]
  %v211 = vld [vmem:[%s4 + $0x50] sm:$0xff]
  %v212 = vld [vmem:[%s4 + $0x58] sm:$0xff]
  %v213 = vld [vmem:[%s4 + $0x60] sm:$0xff]
  %v214 = vld [vmem:[%s4 + $0x68] sm:$0xff]
  %v215 = vld [vmem:[%s4 + $0x70] sm:$0xff]
  %v216 = vld [vmem:[%s4 + $0x78] sm:$0xff]
  %218 = vset.pattern.permute.xlu0 0
  %219 = vperm.xlu0 %218, %v201
  %v220 = vpop.permute.xlu0 %219
  %223 = vset.pattern.permute.xlu0 0
  %224 = vperm.xlu0 %223, %v202
  %v225 = vpop.permute.xlu0 %224
  %228 = vset.pattern.permute.xlu0 0
  %229 = vperm.xlu0 %228, %v203
  %v230 = vpop.permute.xlu0 %229
  %233 = vset.pattern.permute.xlu0 0
  %234 = vperm.xlu0 %233, %v204
  %v235 = vpop.permute.xlu0 %234
  %238 = vset.pattern.permute.xlu0 0
  %239 = vperm.xlu0 %238, %v205
  %v240 = vpop.permute.xlu0 %239
  %243 = vset.pattern.permute.xlu0 0
  %244 = vperm.xlu0 %243, %v206
  %v245 = vpop.permute.xlu0 %244
  %248 = vset.pattern.permute.xlu0 0
  %249 = vperm.xlu0 %248, %v207
  %v250 = vpop.permute.xlu0 %249
  %253 = vset.pattern.permute.xlu0 0
  %254 = vperm.xlu0 %253, %v208
  %v255 = vpop.permute.xlu0 %254
  %258 = vset.pattern.permute.xlu0 0
  %259 = vperm.xlu0 %258, %v209
  %v260 = vpop.permute.xlu0 %259
  %263 = vset.pattern.permute.xlu0 0
  %264 = vperm.xlu0 %263, %v210
  %v265 = vpop.permute.xlu0 %264
  %268 = vset.pattern.permute.xlu0 0
  %269 = vperm.xlu0 %268, %v211
  %v270 = vpop.permute.xlu0 %269
  %273 = vset.pattern.permute.xlu0 0
  %274 = vperm.xlu0 %273, %v212
  %v275 = vpop.permute.xlu0 %274
  %278 = vset.pattern.permute.xlu0 0
  %279 = vperm.xlu0 %278, %v213
  %v280 = vpop.permute.xlu0 %279
  %283 = vset.pattern.permute.xlu0 0
  %284 = vperm.xlu0 %283, %v214
  %v285 = vpop.permute.xlu0 %284
  %288 = vset.pattern.permute.xlu0 0
  %289 = vperm.xlu0 %288, %v215
  %v290 = vpop.permute.xlu0 %289
  %293 = vset.pattern.permute.xlu0 0
  %294 = vperm.xlu0 %293, %v216
  %v295 = vpop.permute.xlu0 %294
  %v313 = vunpack.c.l.b16 %v185
  %v314 = vunpack.c.l.b16 %v186
  %v315 = vunpack.c.l.b16 %v187
  %v316 = vunpack.c.l.b16 %v188
  %v317 = vunpack.c.l.b16 %v189
  %v318 = vunpack.c.l.b16 %v190
  %v319 = vunpack.c.l.b16 %v191
  %v320 = vunpack.c.l.b16 %v192
  %v321 = vunpack.c.l.b16 %v193
  %v322 = vunpack.c.l.b16 %v194
  %v323 = vunpack.c.l.b16 %v195
  %v324 = vunpack.c.l.b16 %v196
  %v325 = vunpack.c.l.b16 %v197
  %v326 = vunpack.c.l.b16 %v198
  %v327 = vunpack.c.l.b16 %v199
  %v328 = vunpack.c.l.b16 %v200
  %v329 = vpack.c.b16 %v314, %v313
  %v330 = vpack.c.b16 %v316, %v315
  %v331 = vpack.c.b16 %v318, %v317
  %v332 = vpack.c.b16 %v320, %v319
  %v333 = vpack.c.b16 %v322, %v321
  %v334 = vpack.c.b16 %v324, %v323
  %v335 = vpack.c.b16 %v326, %v325
  %v336 = vpack.c.b16 %v328, %v327
  %vm337 = vcmask 523264
  %v339 = vsel %vm337, %v329, 0
  %v342 = vsel %vm337, %v330, 0
  %v345 = vsel %vm337, %v331, 0
  %v348 = vsel %vm337, %v332, 0
  %v351 = vsel %vm337, %v333, 0
  %v354 = vsel %vm337, %v334, 0
  %v357 = vsel %vm337, %v335, 0
  %v360 = vsel %vm337, %v336, 0
  %362 = vmatpush.bf16.msra.mxu0 0
  %363 = vmatpush.bf16.msra.mxu0 0
  %364 = vmatpush.bf16.msra.mxu0 0
  %365 = vmatpush.bf16.msra.mxu0 0
  %366 = vmatpush.bf16.msra.mxu0 %v184
  %367 = vmatpush.bf16.msra.mxu0 %v183
  %368 = vmatpush.bf16.msra.mxu0 %v182
  %369 = vmatpush.bf16.msra.mxu0 %v181
  %370 = vmatmul.bf16.gmra.mxu0 %v339
  %v371 = vpop.f32.mrf.mxu0
  %v372 = vadd.f32 %v220, %v371
  %v373 = vpop.f32.mrf.mxu0
  %v374 = vadd.f32 %v225, %v373
  %375 = vmatmul.bf16.gmra.mxu0 %v342
  %v376 = vpop.f32.mrf.mxu0
  %v377 = vadd.f32 %v230, %v376
  %v378 = vpop.f32.mrf.mxu0
  %v379 = vadd.f32 %v235, %v378
  %380 = vmatmul.bf16.gmra.mxu0 %v345
  %v381 = vpop.f32.mrf.mxu0
  %v382 = vadd.f32 %v240, %v381
  %v383 = vpop.f32.mrf.mxu0
  %v384 = vadd.f32 %v245, %v383
  %385 = vmatmul.bf16.gmra.mxu0 %v348
  %v386 = vpop.f32.mrf.mxu0
  %v387 = vadd.f32 %v250, %v386
  %v388 = vpop.f32.mrf.mxu0
  %v389 = vadd.f32 %v255, %v388
  %390 = vmatmul.bf16.gmra.mxu0 %v351
  %v391 = vpop.f32.mrf.mxu0
  %v392 = vadd.f32 %v260, %v391
  %v393 = vpop.f32.mrf.mxu0
  %v394 = vadd.f32 %v265, %v393
  %395 = vmatmul.bf16.gmra.mxu0 %v354
  %v396 = vpop.f32.mrf.mxu0
  %v397 = vadd.f32 %v270, %v396
  %v398 = vpop.f32.mrf.mxu0
  %v399 = vadd.f32 %v275, %v398
  %400 = vmatmul.bf16.gmra.mxu0 %v357
  %v401 = vpop.f32.mrf.mxu0
  %v402 = vadd.f32 %v280, %v401
  %v403 = vpop.f32.mrf.mxu0
  %v404 = vadd.f32 %v285, %v403
  %405 = vmatmul.bf16.gmra.mxu0 %v360
  %v406 = vpop.f32.mrf.mxu0
  %v407 = vadd.f32 %v290, %v406
  %v408 = vpop.f32.mrf.mxu0
  %v409 = vadd.f32 %v295, %v408
  %410 = vdwg.mxu0
  %v411 = vmax.f32 %v372, 0.0
  %v412 = vmax.f32 %v374, 0.0
  %v413 = vmax.f32 %v377, 0.0
  %v414 = vmax.f32 %v379, 0.0
  %v415 = vmax.f32 %v382, 0.0
  %v416 = vmax.f32 %v384, 0.0
  %v417 = vmax.f32 %v387, 0.0
  %v418 = vmax.f32 %v389, 0.0
  %v419 = vmax.f32 %v392, 0.0
  %v420 = vmax.f32 %v394, 0.0
  %v421 = vmax.f32 %v397, 0.0
  %v422 = vmax.f32 %v399, 0.0
  %v423 = vmax.f32 %v402, 0.0
  %v424 = vmax.f32 %v404, 0.0
  %v425 = vmax.f32 %v407, 0.0
  %v426 = vmax.f32 %v409, 0.0
  %v427 = vpack.c.bf16 %v412, %v411
  %v428 = vpack.c.bf16 %v414, %v413
  %v429 = vpack.c.bf16 %v416, %v415
  %v430 = vpack.c.bf16 %v418, %v417
  %v431 = vpack.c.bf16 %v420, %v419
  %v432 = vpack.c.bf16 %v422, %v421
  %v433 = vpack.c.bf16 %v424, %v423
  %v434 = vpack.c.bf16 %v426, %v425
  %v435 = vld [vmem:[%s5] sm:$0xf]
  %v436 = vld [vmem:[%s5 + $0x4] sm:$0xf]
  %v437 = vld [vmem:[%s5 + $0x8] sm:$0xf]
  %v438 = vld [vmem:[%s5 + $0xc] sm:$0xf]
  %v439 = vld [vmem:[%s5 + $0x10] sm:$0xf]
  %v440 = vld [vmem:[%s5 + $0x14] sm:$0xf]
  %v441 = vld [vmem:[%s5 + $0x18] sm:$0xf]
  %v442 = vld [vmem:[%s5 + $0x1c] sm:$0xf]
  %v443 = vld [vmem:[%s5 + $0x20] sm:$0xf]
  %v444 = vld [vmem:[%s5 + $0x24] sm:$0xf]
  %v445 = vld [vmem:[%s5 + $0x28] sm:$0xf]
  %v446 = vld [vmem:[%s5 + $0x2c] sm:$0xf]
  %v447 = vld [vmem:[%s5 + $0x30] sm:$0xf]
  %v448 = vld [vmem:[%s5 + $0x34] sm:$0xf]
  %v449 = vld [vmem:[%s5 + $0x38] sm:$0xf]
  %v450 = vld [vmem:[%s5 + $0x3c] sm:$0xf]
  %v451 = vld [vmem:[%s6] sm:$0xff]
  %v452 = vld [vmem:[%s6 + $0x8] sm:$0xff]
  %v453 = vld [vmem:[%s6 + $0x10] sm:$0xff]
  %v454 = vld [vmem:[%s6 + $0x18] sm:$0xff]
  %v455 = vld [vmem:[%s6 + $0x20] sm:$0xff]
  %v456 = vld [vmem:[%s6 + $0x28] sm:$0xff]
  %v457 = vld [vmem:[%s6 + $0x30] sm:$0xff]
  %v458 = vld [vmem:[%s6 + $0x38] sm:$0xff]
  %v459 = vld [vmem:[%s6 + $0x40] sm:$0xff]
  %v460 = vld [vmem:[%s6 + $0x48] sm:$0xff]
  %v461 = vld [vmem:[%s6 + $0x50] sm:$0xff]
  %v462 = vld [vmem:[%s6 + $0x58] sm:$0xff]
  %v463 = vld [vmem:[%s6 + $0x60] sm:$0xff]
  %v464 = vld [vmem:[%s6 + $0x68] sm:$0xff]
  %v465 = vld [vmem:[%s6 + $0x70] sm:$0xff]
  %v466 = vld [vmem:[%s6 + $0x78] sm:$0xff]
  %468 = vset.pattern.permute.xlu0 0
  %469 = vperm.xlu0 %468, %v451
  %v470 = vpop.permute.xlu0 %469
  %473 = vset.pattern.permute.xlu0 0
  %474 = vperm.xlu0 %473, %v452
  %v475 = vpop.permute.xlu0 %474
  %478 = vset.pattern.permute.xlu0 0
  %479 = vperm.xlu0 %478, %v453
  %v480 = vpop.permute.xlu0 %479
  %483 = vset.pattern.permute.xlu0 0
  %484 = vperm.xlu0 %483, %v454
  %v485 = vpop.permute.xlu0 %484
  %488 = vset.pattern.permute.xlu0 0
  %489 = vperm.xlu0 %488, %v455
  %v490 = vpop.permute.xlu0 %489
  %493 = vset.pattern.permute.xlu0 0
  %494 = vperm.xlu0 %493, %v456
  %v495 = vpop.permute.xlu0 %494
  %498 = vset.pattern.permute.xlu0 0
  %499 = vperm.xlu0 %498, %v457
  %v500 = vpop.permute.xlu0 %499
  %503 = vset.pattern.permute.xlu0 0
  %504 = vperm.xlu0 %503, %v458
  %v505 = vpop.permute.xlu0 %504
  %508 = vset.pattern.permute.xlu0 0
  %509 = vperm.xlu0 %508, %v459
  %v510 = vpop.permute.xlu0 %509
  %513 = vset.pattern.permute.xlu0 0
  %514 = vperm.xlu0 %513, %v460
  %v515 = vpop.permute.xlu0 %514
  %518 = vset.pattern.permute.xlu0 0
  %519 = vperm.xlu0 %518, %v461
  %v520 = vpop.permute.xlu0 %519
  %523 = vset.pattern.permute.xlu0 0
  %524 = vperm.xlu0 %523, %v462
  %v525 = vpop.permute.xlu0 %524
  %528 = vset.pattern.permute.xlu0 0
  %529 = vperm.xlu0 %528, %v463
  %v530 = vpop.permute.xlu0 %529
  %533 = vset.pattern.permute.xlu0 0
  %534 = vperm.xlu0 %533, %v464
  %v535 = vpop.permute.xlu0 %534
  %538 = vset.pattern.permute.xlu0 0
  %539 = vperm.xlu0 %538, %v465
  %v540 = vpop.permute.xlu0 %539
  %543 = vset.pattern.permute.xlu0 0
  %544 = vperm.xlu0 %543, %v466
  %v545 = vpop.permute.xlu0 %544
  %v563 = vunpack.c.l.b16 %v435
  %v564 = vunpack.c.l.b16 %v436
  %v565 = vunpack.c.l.b16 %v437
  %v566 = vunpack.c.l.b16 %v438
  %v567 = vunpack.c.l.b16 %v439
  %v568 = vunpack.c.l.b16 %v440
  %v569 = vunpack.c.l.b16 %v441
  %v570 = vunpack.c.l.b16 %v442
  %v571 = vunpack.c.l.b16 %v443
  %v572 = vunpack.c.l.b16 %v444
  %v573 = vunpack.c.l.b16 %v445
  %v574 = vunpack.c.l.b16 %v446
  %v575 = vunpack.c.l.b16 %v447
  %v576 = vunpack.c.l.b16 %v448
  %v577 = vunpack.c.l.b16 %v449
  %v578 = vunpack.c.l.b16 %v450
  %v579 = vpack.c.b16 %v564, %v563
  %v580 = vpack.c.b16 %v566, %v565
  %v581 = vpack.c.b16 %v568, %v567
  %v582 = vpack.c.b16 %v570, %v569
  %v583 = vpack.c.b16 %v572, %v571
  %v584 = vpack.c.b16 %v574, %v573
  %v585 = vpack.c.b16 %v576, %v575
  %v586 = vpack.c.b16 %v578, %v577
  %595 = vmatpush.bf16.msra.mxu0 %v434
  %596 = vmatpush.bf16.msra.mxu0 %v433
  %597 = vmatpush.bf16.msra.mxu0 %v432
  %598 = vmatpush.bf16.msra.mxu0 %v431
  %599 = vmatpush.bf16.msra.mxu0 %v430
  %600 = vmatpush.bf16.msra.mxu0 %v429
  %601 = vmatpush.bf16.msra.mxu0 %v428
  %602 = vmatpush.bf16.msra.mxu0 %v427
  %603 = vmatmul.bf16.gmra.mxu0 %v579
  %v604 = vpop.f32.mrf.mxu0
  %v605 = vadd.f32 %v470, %v604
  %v606 = vpop.f32.mrf.mxu0
  %v607 = vadd.f32 %v475, %v606
  %608 = vmatmul.bf16.gmra.mxu0 %v580
  %v609 = vpop.f32.mrf.mxu0
  %v610 = vadd.f32 %v480, %v609
  %v611 = vpop.f32.mrf.mxu0
  %v612 = vadd.f32 %v485, %v611
  %613 = vmatmul.bf16.gmra.mxu0 %v581
  %v614 = vpop.f32.mrf.mxu0
  %v615 = vadd.f32 %v490, %v614
  %v616 = vpop.f32.mrf.mxu0
  %v617 = vadd.f32 %v495, %v616
  %618 = vmatmul.bf16.gmra.mxu0 %v582
  %v619 = vpop.f32.mrf.mxu0
  %v620 = vadd.f32 %v500, %v619
  %v621 = vpop.f32.mrf.mxu0
  %v622 = vadd.f32 %v505, %v621
  %623 = vmatmul.bf16.gmra.mxu0 %v583
  %v624 = vpop.f32.mrf.mxu0
  %v625 = vadd.f32 %v510, %v624
  %v626 = vpop.f32.mrf.mxu0
  %v627 = vadd.f32 %v515, %v626
  %628 = vmatmul.bf16.gmra.mxu0 %v584
  %v629 = vpop.f32.mrf.mxu0
  %v630 = vadd.f32 %v520, %v629
  %v631 = vpop.f32.mrf.mxu0
  %v632 = vadd.f32 %v525, %v631
  %633 = vmatmul.bf16.gmra.mxu0 %v585
  %v634 = vpop.f32.mrf.mxu0
  %v635 = vadd.f32 %v530, %v634
  %v636 = vpop.f32.mrf.mxu0
  %v637 = vadd.f32 %v535, %v636
  %638 = vmatmul.bf16.gmra.mxu0 %v586
  %v639 = vpop.f32.mrf.mxu0
  %v640 = vadd.f32 %v540, %v639
  %v641 = vpop.f32.mrf.mxu0
  %v642 = vadd.f32 %v545, %v641
  %643 = vdwg.mxu0
  %v644 = vmax.f32 %v605, 0.0
  %v645 = vmax.f32 %v607, 0.0
  %v646 = vmax.f32 %v610, 0.0
  %v647 = vmax.f32 %v612, 0.0
  %v648 = vmax.f32 %v615, 0.0
  %v649 = vmax.f32 %v617, 0.0
  %v650 = vmax.f32 %v620, 0.0
  %v651 = vmax.f32 %v622, 0.0
  %v652 = vmax.f32 %v625, 0.0
  %v653 = vmax.f32 %v627, 0.0
  %v654 = vmax.f32 %v630, 0.0
  %v655 = vmax.f32 %v632, 0.0
  %v656 = vmax.f32 %v635, 0.0
  %v657 = vmax.f32 %v637, 0.0
  %v658 = vmax.f32 %v640, 0.0
  %v659 = vmax.f32 %v642, 0.0
  %v660 = vpack.c.bf16 %v645, %v644
  %v661 = vpack.c.bf16 %v647, %v646
  %v662 = vpack.c.bf16 %v649, %v648
  %v663 = vpack.c.bf16 %v651, %v650
  %v664 = vpack.c.bf16 %v653, %v652
  %v665 = vpack.c.bf16 %v655, %v654
  %v666 = vpack.c.bf16 %v657, %v656
  %v667 = vpack.c.bf16 %v659, %v658
  %v668 = vld [vmem:[%s7] sm:$0xf]
  %v669 = vld [vmem:[%s7 + $0x4] sm:$0xf]
  %v670 = vld [vmem:[%s7 + $0x8] sm:$0xf]
  %v671 = vld [vmem:[%s7 + $0xc] sm:$0xf]
  %v672 = vld [vmem:[%s7 + $0x10] sm:$0xf]
  %v673 = vld [vmem:[%s7 + $0x14] sm:$0xf]
  %v674 = vld [vmem:[%s7 + $0x18] sm:$0xf]
  %v675 = vld [vmem:[%s7 + $0x1c] sm:$0xf]
  %v676 = vld [vmem:[%s8] sm:$0xff]
  %v677 = vld [vmem:[%s8 + $0x8] sm:$0xff]
  %v678 = vld [vmem:[%s8 + $0x10] sm:$0xff]
  %v679 = vld [vmem:[%s8 + $0x18] sm:$0xff]
  %v680 = vld [vmem:[%s8 + $0x20] sm:$0xff]
  %v681 = vld [vmem:[%s8 + $0x28] sm:$0xff]
  %v682 = vld [vmem:[%s8 + $0x30] sm:$0xff]
  %v683 = vld [vmem:[%s8 + $0x38] sm:$0xff]
  %685 = vset.pattern.permute.xlu0 0
  %686 = vperm.xlu0 %685, %v676
  %v687 = vpop.permute.xlu0 %686
  %690 = vset.pattern.permute.xlu0 0
  %691 = vperm.xlu0 %690, %v677
  %v692 = vpop.permute.xlu0 %691
  %695 = vset.pattern.permute.xlu0 0
  %696 = vperm.xlu0 %695, %v678
  %v697 = vpop.permute.xlu0 %696
  %700 = vset.pattern.permute.xlu0 0
  %701 = vperm.xlu0 %700, %v679
  %v702 = vpop.permute.xlu0 %701
  %705 = vset.pattern.permute.xlu0 0
  %706 = vperm.xlu0 %705, %v680
  %v707 = vpop.permute.xlu0 %706
  %710 = vset.pattern.permute.xlu0 0
  %711 = vperm.xlu0 %710, %v681
  %v712 = vpop.permute.xlu0 %711
  %715 = vset.pattern.permute.xlu0 0
  %716 = vperm.xlu0 %715, %v682
  %v717 = vpop.permute.xlu0 %716
  %720 = vset.pattern.permute.xlu0 0
  %721 = vperm.xlu0 %720, %v683
  %v722 = vpop.permute.xlu0 %721
  %v732 = vunpack.c.l.b16 %v668
  %v733 = vunpack.c.l.b16 %v669
  %v734 = vunpack.c.l.b16 %v670
  %v735 = vunpack.c.l.b16 %v671
  %v736 = vunpack.c.l.b16 %v672
  %v737 = vunpack.c.l.b16 %v673
  %v738 = vunpack.c.l.b16 %v674
  %v739 = vunpack.c.l.b16 %v675
  %v740 = vpack.c.b16 %v733, %v732
  %v741 = vpack.c.b16 %v735, %v734
  %v742 = vpack.c.b16 %v737, %v736
  %v743 = vpack.c.b16 %v739, %v738
  %748 = vmatpush.bf16.msra.mxu0 %v667
  %749 = vmatpush.bf16.msra.mxu0 %v666
  %750 = vmatpush.bf16.msra.mxu0 %v665
  %751 = vmatpush.bf16.msra.mxu0 %v664
  %752 = vmatpush.bf16.msra.mxu0 %v663
  %753 = vmatpush.bf16.msra.mxu0 %v662
  %754 = vmatpush.bf16.msra.mxu0 %v661
  %755 = vmatpush.bf16.msra.mxu0 %v660
  %756 = vmatmul.bf16.gmra.mxu0 %v740
  %v757 = vpop.f32.mrf.mxu0
  %v758 = vadd.f32 %v687, %v757
  %v759 = vpop.f32.mrf.mxu0
  %v760 = vadd.f32 %v692, %v759
  %761 = vmatmul.bf16.gmra.mxu0 %v741
  %v762 = vpop.f32.mrf.mxu0
  %v763 = vadd.f32 %v697, %v762
  %v764 = vpop.f32.mrf.mxu0
  %v765 = vadd.f32 %v702, %v764
  %766 = vmatmul.bf16.gmra.mxu0 %v742
  %v767 = vpop.f32.mrf.mxu0
  %v768 = vadd.f32 %v707, %v767
  %v769 = vpop.f32.mrf.mxu0
  %v770 = vadd.f32 %v712, %v769
  %771 = vmatmul.bf16.gmra.mxu0 %v743
  %v772 = vpop.f32.mrf.mxu0
  %v773 = vadd.f32 %v717, %v772
  %v774 = vpop.f32.mrf.mxu0
  %v775 = vadd.f32 %v722, %v774
  %776 = vdwg.mxu0
  %v777 = vmax.f32 %v758, 0.0
  %v778 = vmax.f32 %v760, 0.0
  %v779 = vmax.f32 %v763, 0.0
  %v780 = vmax.f32 %v765, 0.0
  %v781 = vmax.f32 %v768, 0.0
  %v782 = vmax.f32 %v770, 0.0
  %v783 = vmax.f32 %v773, 0.0
  %v784 = vmax.f32 %v775, 0.0
  %v785 = vpack.c.bf16 %v778, %v777
  %v786 = vpack.c.bf16 %v780, %v779
  %v787 = vpack.c.bf16 %v782, %v781
  %v788 = vpack.c.bf16 %v784, %v783
  %v789 = vld [vmem:[%s9] sm:$0xf]
  %v790 = vld [vmem:[%s9 + $0x4] sm:$0xf]
  %v791 = vld [vmem:[%s10] sm:$0xff]
  %v792 = vld [vmem:[%s10 + $0x8] sm:$0xff]
  %794 = vset.pattern.permute.xlu0 0
  %795 = vperm.xlu0 %794, %v791
  %v796 = vpop.permute.xlu0 %795
  %799 = vset.pattern.permute.xlu0 0
  %800 = vperm.xlu0 %799, %v792
  %v801 = vpop.permute.xlu0 %800
  %v805 = vunpack.c.l.b16 %v789
  %v806 = vunpack.c.l.b16 %v790
  %v807 = vpack.c.b16 %v806, %v805
  %v809 = vsel %vm337, %v807, 0
  %811 = vmatpush.bf16.msra.mxu0 0
  %812 = vmatpush.bf16.msra.mxu0 0
  %813 = vmatpush.bf16.msra.mxu0 0
  %814 = vmatpush.bf16.msra.mxu0 0
  %815 = vmatpush.bf16.msra.mxu0 %v788
  %816 = vmatpush.bf16.msra.mxu0 %v787
  %817 = vmatpush.bf16.msra.mxu0 %v786
  %818 = vmatpush.bf16.msra.mxu0 %v785
  %819 = vmatmul.bf16.gmra.mxu0 %v809
  %v820 = vpop.f32.mrf.mxu0
  %v821 = vadd.f32 %v796, %v820
  %v822 = vpop.f32.mrf.mxu0
  %v823 = vadd.f32 %v801, %v822
  %824 = vdwg.mxu0
  %v825 = vlaneseq
  %v826 = vshrl.u32 %v825, 7
  %v827 = vadd.s32 %v826, 8
  %vm828 = vcmp.lt.s32.totalorder %v826, 10
  %vm829 = vcmp.lt.s32.totalorder %v827, 10
  %v830 = vsel %vm828, %v821, -1e+30
  %v831 = vsel %vm829, %v823, -1e+30
  %vm832 = vcmask 64512
  %v833 = vsel %vm832, %v830, -inf
  %v834 = vsel %vm832, %v831, -inf
  %v835 = vmax.f32 %v833, %v834
  %v836 = vrot.slane %v835, 4
  %v837 = vmax.f32 %v835, %v836
  %v838 = vrot.slane %v837, 2
  %v839 = vmax.f32 %v837, %v838
  %v840 = vrot.slane %v839, 1
  %v841 = vmax.f32 %v839, %v840
  %v842 = vsub.f32 %v830, %v841
  %v843 = vsub.f32 %v831, %v841
  %v844 = vmul.f32 %v842, 1.442695
  %v845 = vpow.pop %v844
  %v846 = vmul.f32 %v843, 1.442695
  %v847 = vpow.pop %v846
  %v848 = vsel %vm832, %v845, 0.0
  %v849 = vsel %vm832, %v847, 0.0
  %v850 = vadd.f32 %v848, %v849
  %v851 = vrot.slane %v850, 4
  %v852 = vadd.f32 %v850, %v851
  %v853 = vrot.slane %v852, 2
  %v854 = vadd.f32 %v852, %v853
  %v855 = vrot.slane %v854, 1
  %v856 = vadd.f32 %v854, %v855
  %v857 = vrcp.pop %v856
  %v858 = vmul.f32 %v845, %v857
  %v859 = vmul.f32 %v847, %v857
  %860 = vst.msk [vmem:[%s11] sm:$0xff] %vm832, %v858
  %861 = vst.msk [vmem:[%s11 + $0x8] sm:$0xff] %vm832, %v859
  // Predicated region
  $region46: #{anet_forward.1} parent=0 // pred_check
    _
  $region47: #{anet_forward.1} parent=0 // pred_check_branch
    %863 = sbr.rel (0) target = $region49
  $region48: #{anet_forward.1} parent=0 // pred_region
    _
  $region49: #{anet_forward.1} parent=0 // pred_fallthru
    _
  // Predicated region
  $region50: #{anet_forward.1} parent=0 // pred_check
    _
  $region51: #{anet_forward.1} parent=0 // pred_check_branch
    %865 = sbr.rel (0) target = $region53
  $region52: #{anet_forward.1} parent=0 // pred_region
    _
  $region53: #{anet_forward.1} parent=0 // pred_fallthru
    _

</llo_original>
